<compile_context>
chip_gen: v7x
topology: tpu7x:2x2x1
jax: 0.10.0
libtpu: 0.0.40
codegen_flags: <defaults>
</compile_context>

<pallas_src>
from functools import partial

import jax
import jax.numpy as jnp
from jax.experimental import pallas as pl
from jax.experimental.pallas import tpu as pltpu


# ----------------------------- Kernel 1: projection -----------------------------
def linear_kernel(x_ref, w_ref, o_ref):
    # x_ref: [TM, fin], w_ref: [fin, H*F] (pre-transposed), o_ref: [TM, H*F]
    o_ref[...] = jnp.dot(x_ref[...], w_ref[...], preferred_element_type=jnp.float32)


# --------------------------- Kernel 2: GAT attention ----------------------------
def gat_attention_kernel(src_col_ref, tgt_col_ref, tgt_row_ref, feat_ref,
                         smap_ref, tmap_ref, o_ref, num_ref, den_ref,
                         *, alpha, num_heads, fout):
    # src_col_ref: [TE, 1] int32  source node id per edge (this edge tile)
    # tgt_col_ref: [TE, 1] int32  target node id per edge
    # tgt_row_ref: [1, TE] int32  target node id per edge (row layout for the scatter)
    # feat_ref:    [N, H*F] f32   node-major projected features (all heads)
    # smap_ref:    [H*F, H] f32   block-diagonal source scorer map
    # tmap_ref:    [H*F, H] f32   block-diagonal target scorer map
    # o_ref:       [TN, H*F] f32  this node block of the concat output
    # num_ref/den_ref: VMEM accumulators [TN, H*F] / [TN, H]
    H, F = num_heads, fout
    N, HF = feat_ref.shape
    TE = src_col_ref.shape[0]
    TN = o_ref.shape[0]
    nb = pl.program_id(0)
    et = pl.program_id(1)

    @pl.when(et == 0)
    def _():
        num_ref[...] = jnp.zeros_like(num_ref)
        den_ref[...] = jnp.zeros_like(den_ref)

    feat = feat_ref[...]                                                   # [N, HF]
    # Per-node source / target scores for all heads at once: [N, H] each.
    s_src_n = jnp.dot(feat, smap_ref[...], preferred_element_type=jnp.float32)
    s_tgt_n = jnp.dot(feat, tmap_ref[...], preferred_element_type=jnp.float32)

    # One-hot gather matrices for this edge tile.
    iota_en = jax.lax.broadcasted_iota(jnp.int32, (TE, N), 1)
    src_oh = (src_col_ref[...] == iota_en).astype(jnp.float32)             # [TE, N]
    tgt_oh = (tgt_col_ref[...] == iota_en).astype(jnp.float32)             # [TE, N]

    # Per-edge attention logits for all heads, ELU(alpha), exp.
    s = (jnp.dot(src_oh, s_src_n, preferred_element_type=jnp.float32)
         + jnp.dot(tgt_oh, s_tgt_n, preferred_element_type=jnp.float32))   # [TE, H]
    s = jnp.where(s > 0, s, alpha * (jnp.exp(s) - 1.0))                    # torch.nn.ELU(0.2)
    se = jnp.exp(s)                                                        # [TE, H]

    # Gather source features for all heads at once: [TE, H*F].
    sel_f = jnp.dot(src_oh, feat, preferred_element_type=jnp.float32)

    # Broadcast se [TE, H] -> [TE, H*F] via a tiny block-expansion matmul (no lane reshapes).
    col_head = jax.lax.broadcasted_iota(jnp.int32, (H, HF), 1) // F
    row_head = jax.lax.broadcasted_iota(jnp.int32, (H, HF), 0)
    expand = (col_head == row_head).astype(jnp.float32)                    # [H, HF]
    wf = sel_f * jnp.dot(se, expand, preferred_element_type=jnp.float32)   # [TE, HF]

    # Scatter-add into this node block (padded edges have tgt == N -> all-zero columns).
    row_ids = nb * TN + jax.lax.broadcasted_iota(jnp.int32, (TN, TE), 0)
    tgt_oh_t = (row_ids == tgt_row_ref[...]).astype(jnp.float32)           # [TN, TE]

    num_ref[...] += jnp.dot(tgt_oh_t, wf, preferred_element_type=jnp.float32)   # [TN, HF]
    den_ref[...] += jnp.dot(tgt_oh_t, se, preferred_element_type=jnp.float32)   # [TN, H]

    @pl.when(et == pl.num_programs(1) - 1)
    def _():
        den_wide = jnp.dot(den_ref[...], expand, preferred_element_type=jnp.float32)
        den_safe = jnp.where(den_wide > 0.0, den_wide, 1.0)   # isolated target nodes -> 0
        o_ref[...] = num_ref[...] / den_safe


# --------------------------------- Wrapper --------------------------------------
def gat_layer_forward(x, edge_index, w_t, src_scorer, tgt_scorer, num_heads, fout,
                      concat=True, edge_tile=128, node_tile=32, m_tile=32):
    N, fin = x.shape
    H, F = num_heads, fout
    HF = H * F
    E = edge_index.shape[0]
    assert N % node_tile == 0 and N % m_tile == 0

    # ---- Kernel 1: projection (drop1 is eval-mode identity) ----
    xw = pl.pallas_call(
        linear_kernel,
        grid=(N // m_tile,),
        in_specs=[pl.BlockSpec((m_tile, fin), lambda i: (i, 0)),
                  pl.BlockSpec((fin, HF), lambda i: (0, 0))],
        out_specs=pl.BlockSpec((m_tile, HF), lambda i: (i, 0)),
        out_shape=jax.ShapeDtypeStruct((N, HF), jnp.float32),
        compiler_params=pltpu.CompilerParams(dimension_semantics=("parallel",)),
    )(x, w_t)

    # Glue: reference's `.view(H, -1, F)` followed by a node-major re-layout so the
    # attention kernel is head-batched and the output is lane-dense [N, H*F].
    feat_hnf = xw.reshape(H, N, F)
    feat2 = jnp.transpose(feat_hnf, (1, 0, 2)).reshape(N, HF)   # feat2[n, h*F+f] = feat[h,n,f]

    # Block-diagonal scorer maps: (feat2 @ src_map)[n, h] = sum_f feat[h,n,f]*src_scorer[h,f]
    eye = jnp.eye(H, dtype=jnp.float32)
    ssc = src_scorer.reshape(H, F)
    tsc = tgt_scorer.reshape(H, F)
    src_map = (ssc[:, :, None] * eye[:, None, :]).reshape(HF, H)
    tgt_map = (tsc[:, :, None] * eye[:, None, :]).reshape(HF, H)

    # Pad edges to a multiple of edge_tile; padded targets = N (out of range) so they
    # contribute nothing to the scatter accumulation.
    E_pad = ((E + edge_tile - 1) // edge_tile) * edge_tile
    src = jnp.pad(edge_index[:, 0].astype(jnp.int32), (0, E_pad - E), constant_values=0)
    tgt = jnp.pad(edge_index[:, 1].astype(jnp.int32), (0, E_pad - E), constant_values=N)
    src_col = src.reshape(E_pad, 1)
    tgt_col = tgt.reshape(E_pad, 1)
    tgt_row = tgt.reshape(1, E_pad)

    nb = N // node_tile
    et = E_pad // edge_tile

    out2 = pl.pallas_call(
        partial(gat_attention_kernel, alpha=0.2, num_heads=H, fout=F),
        grid=(nb, et),
        in_specs=[
            pl.BlockSpec((edge_tile, 1), lambda b, e: (e, 0)),   # src ids (edge tile)
            pl.BlockSpec((edge_tile, 1), lambda b, e: (e, 0)),   # tgt ids (edge tile)
            pl.BlockSpec((1, edge_tile), lambda b, e: (0, e)),   # tgt ids, row layout
            pl.BlockSpec((N, HF), lambda b, e: (0, 0)),          # feat2 resident
            pl.BlockSpec((HF, H), lambda b, e: (0, 0)),
            pl.BlockSpec((HF, H), lambda b, e: (0, 0)),
        ],
        out_specs=pl.BlockSpec((node_tile, HF), lambda b, e: (b, 0)),
        out_shape=jax.ShapeDtypeStruct((N, HF), jnp.float32),
        scratch_shapes=[pltpu.VMEM((node_tile, HF), jnp.float32),
                        pltpu.VMEM((node_tile, H), jnp.float32)],
        compiler_params=pltpu.CompilerParams(
            dimension_semantics=("parallel", "arbitrary"),
            vmem_limit_bytes=32 * 1024 * 1024),
    )(src_col, tgt_col, tgt_row, feat2, src_map, tgt_map)

    if concat:
        # out2 is already the concat layout [N, H*F] (lane-dense, no wrapper transpose).
        return out2
    return out2.reshape(N, H, F).mean(axis=1)


# ----------------------------- Plain-JAX reference ------------------------------
def reference_forward(x, edge_index, w_t, ssc3, tsc3, num_heads, fout, concat=True):
    N = x.shape[0]
    xw = x @ w_t
    feat = xw.reshape(num_heads, N, fout)                 # the reference's .view
    src_scores = (feat * ssc3).sum(-1)                    # [H, N]
    tgt_scores = (feat * tsc3).sum(-1)                    # [H, N]
    src = edge_index[:, 0]
    tgt = edge_index[:, 1]
    s = src_scores[:, src] + tgt_scores[:, tgt]           # [H, E]
    s = jnp.where(s > 0, s, 0.2 * (jnp.exp(s) - 1.0))     # ELU(0.2)
    e = jnp.exp(s)
    denom = jnp.zeros((num_heads, N), jnp.float32).at[:, tgt].add(e)
    att = e / denom[:, tgt]
    wf = feat[:, src, :] * att[..., None]
    out = jnp.zeros((num_heads, N, fout), jnp.float32).at[:, tgt, :].add(wf)
    if concat:
        return jnp.transpose(out, (1, 0, 2)).reshape(N, num_heads * fout)
    return out.mean(axis=0)


def _xavier_uniform(key, shape, fan_in, fan_out, gain=1.0):
    bound = gain * (6.0 / (fan_in + fan_out)) ** 0.5
    return jax.random.uniform(key, shape, jnp.float32, -bound, bound)


if __name__ == "__main__":
    # Small deterministic problem: 64 nodes, fin=16, 4 heads, fout=8, 300 edges
    # (edge axis pads to 384 -> 3 edge tiles; node axis -> 2 parallel node blocks).
    N, FIN, H, FOUT, E = 64, 16, 4, 8, 300

    key = jax.random.PRNGKey(0)
    kx, ke, kw, ks, kt = jax.random.split(key, 5)

    x = jax.random.normal(kx, (N, FIN), jnp.float32)
    edge_index = jax.random.randint(ke, (E, 2), 0, N, jnp.int32)

    # Parameters (deterministic xavier-uniform, matching the module's shapes).
    # torch Linear weight is [H*FOUT, FIN]; we carry it pre-transposed as [FIN, H*FOUT].
    w_t = _xavier_uniform(kw, (FIN, H * FOUT), fan_in=FIN, fan_out=H * FOUT, gain=1.414)
    src_scorer = _xavier_uniform(ks, (H, 1, FOUT), fan_in=FOUT, fan_out=H * FOUT)
    tgt_scorer = _xavier_uniform(kt, (H, 1, FOUT), fan_in=FOUT, fan_out=H * FOUT)

    out = gat_layer_forward(x, edge_index, w_t, src_scorer, tgt_scorer,
                            num_heads=H, fout=FOUT, concat=True)
    out = jax.block_until_ready(out)

    ref = reference_forward(x, edge_index, w_t, src_scorer, tgt_scorer,
                            num_heads=H, fout=FOUT, concat=True)
    ref = jax.block_until_ready(ref)

    assert out.shape == (N, H * FOUT), out.shape
    assert jnp.allclose(out, ref, atol=1e-4, rtol=1e-4), \
        f"max abs err = {jnp.max(jnp.abs(out - ref))}"

    print("KERNEL_OK")
</pallas_src>

<mosaic_0001>
module attributes {stable_mosaic.version = 11 : i64} {
  func.func @linear_kernel(%arg0: i32, %arg1: memref<32x16xf32, #tpu.memory_space<vmem>>, %arg2: memref<16x32xf32, #tpu.memory_space<vmem>>, %arg3: memref<32x32xf32, #tpu.memory_space<vmem>>) attributes {dimension_semantics = [#tpu.dimension_semantics<parallel>], iteration_bounds = array<i64: 2>, scalar_prefetch = 0 : i64, scratch_operands = 0 : i64, tpu.core_type = #tpu.core_type<tc>, window_params = [{transform_indices = @transform_0, window_bounds = array<i64: 32, 16>}, {pipeline_mode = #tpu.pipeline_mode<synchronous>, transform_indices = @transform_1, window_bounds = array<i64: 16, 32>}, {transform_indices = @transform_2, window_bounds = array<i64: 32, 32>}]} {
    %c0 = arith.constant 0 : index
    %c0_0 = arith.constant 0 : index
    %0 = vector.load %arg1[%c0, %c0_0] : memref<32x16xf32, #tpu.memory_space<vmem>>, vector<32x16xf32>
    %c0_1 = arith.constant 0 : index
    %c0_2 = arith.constant 0 : index
    %1 = vector.load %arg2[%c0_1, %c0_2] : memref<16x32xf32, #tpu.memory_space<vmem>>, vector<16x32xf32>
    %cst = arith.constant dense<0.000000e+00> : vector<32x32xf32>
    %2 = tpu.matmul %0, %1, %cst {dimension_numbers = #tpu.dot_dimension_numbers<[1], [0], [0], [1], [0, 0, 1, 1], [], []>} : vector<32x16xf32>, vector<16x32xf32>, vector<32x32xf32> -> vector<32x32xf32>
    %c0_3 = arith.constant 0 : index
    %c0_4 = arith.constant 0 : index
    %3 = vector.load %arg3[%c0_3, %c0_4] : memref<32x32xf32, #tpu.memory_space<vmem>>, vector<32x32xf32>
    tpu.vector_store %arg3[%c0_3, %c0_4], %2 {strides = array<i32>} : memref<32x32xf32, #tpu.memory_space<vmem>>, vector<32x32xf32>,
    return
  }
  func.func @transform_0(%arg0: i32) -> (i32, i32) {
    %c0_i32 = arith.constant 0 : i32
    %c0_i32_0 = arith.constant 0 : i32
    return %arg0, %c0_i32 : i32, i32
  }
  func.func @transform_1(%arg0: i32) -> (i32, i32) {
    %c0_i32 = arith.constant 0 : i32
    %c0_i32_0 = arith.constant 0 : i32
    %c0_i32_1 = arith.constant 0 : i32
    return %c0_i32, %c0_i32_0 : i32, i32
  }
  func.func @transform_2(%arg0: i32) -> (i32, i32) {
    %c0_i32 = arith.constant 0 : i32
    %c0_i32_0 = arith.constant 0 : i32
    return %arg0, %c0_i32 : i32, i32
  }
}

</mosaic_0001>

<llo_original>
// kernel: tpu_custom_call.1
$region0: #{tpu_custom_call.1}
  #allocation0 [shape = 'u32[]', space=smem, size = 0x4, offset = 0x4, fixed_abs, tag = 'smem constant byte address 0x4 - core index']
  #allocation1 [shape = 'u32[144,128]{1,0:T(1,128)}', space=vmem, size = 0x12000, scoped, tag = 'internal scratch']
  %s0 = inlined_call_operand.vmem [shape: f32[64,16], index: 0, kind: input, shape index: {}]
  %s1 = inlined_call_operand.vmem [shape: f32[16,32], index: 1, kind: input, shape index: {}]
  %s2 = inlined_call_operand.vmem [shape: f32[64,32], index: 2, kind: output, shape index: {}]
  %s3 = sld [smem:[#allocation0]]
  $region41: #{tpu_custom_call.1} parent=0
    _
  %s5 = ssub.s32 1, %s3
  %s6 = scalar_select 0, %s5, %s3
  loop: start=0, step=1, limit=4
  $region2: #{tpu_custom_call.1} parent=0 // loop_pre_header
    _
  $region3: #{tpu_custom_call.1} parent=0 // loop_header
    %s8 = sphi 0, %s12
    %p9 = scmp.ge.s32.totalorder %s8, 4
    %s18 = sphi 0, %s20
    %s21 = sphi 0, %s18
    %s22 = sphi 0, %s21
    %s38 = sphi 0, %s22
    %s42 = sphi 0, %s42
    %s44 = sphi 0, %s42
    %s45 = sphi 0, %s44
    %s59 = sphi 0, %s45
    %s65 = sphi 0, %s67
    %s68 = sphi 0, %s65
    %s69 = sphi 0, %s68
    %s85 = sphi 0, %s69
  $region4: #{tpu_custom_call.1} parent=0 // loop_header_branch
    %11 = sbr.rel (%p9) target = $region8
  $region5: #{tpu_custom_call.1} parent=0 // loop_body
    %s13 = ssub.s32 %s8, 1
    %s14 = ssub.s32 %s8, 2
    %s15 = sadd.s32 %s8, 1
    %s16 = ssub.s32 %s8, %s15
    %p17 = scmp.eq.s32.totalorder %s16, 0
    %s19 = sadd.s32 %s18, 1
    %s20 = scalar_select %p17, %s18, %s19
    %p23 = pneg %p17
    %p24 = scmp.eq.s32.totalorder %s8, 1
    %p25 = por %p23, %p24
    %p26 = scmp.ne.s32.totalorder %s18, %s21
    %p27 = scmp.eq.s32.totalorder %s8, 0
    %p28 = por %p26, %p27
    %p29 = scmp.ne.s32.totalorder %s18, %s21
    %p30 = scmp.eq.s32.totalorder %s13, 1
    %p31 = por %p29, %p30
    %p32 = scmp.ne.s32.totalorder %s21, %s22
    %p33 = scmp.eq.s32.totalorder %s13, 0
    %p34 = por %p32, %p33
    %p35 = scmp.ne.s32.totalorder %s21, %s22
    %p36 = scmp.eq.s32.totalorder %s14, 1
    %p37 = por %p35, %p36
    %p39 = scmp.ne.s32.totalorder %s22, %s38
    %p40 = scmp.eq.s32.totalorder %s14, 0
    %p41 = por %p39, %p40
    %s43 = sadd.s32 %s42, 1
    %p46 = scmp.eq.s32.totalorder %s8, 1
    %p47 = scmp.ne.s32.totalorder %s42, %s44
    %p48 = scmp.eq.s32.totalorder %s8, 0
    %p49 = por %p47, %p48
    %p50 = scmp.ne.s32.totalorder %s42, %s44
    %p51 = scmp.eq.s32.totalorder %s13, 1
    %p52 = por %p50, %p51
    %p53 = scmp.ne.s32.totalorder %s44, %s45
    %p54 = scmp.eq.s32.totalorder %s13, 0
    %p55 = por %p53, %p54
    %p56 = scmp.ne.s32.totalorder %s44, %s45
    %p57 = scmp.eq.s32.totalorder %s14, 1
    %p58 = por %p56, %p57
    %p60 = scmp.ne.s32.totalorder %s45, %s59
    %p61 = scmp.eq.s32.totalorder %s14, 0
    %p62 = por %p60, %p61
    %s63 = ssub.s32 %s8, %s15
    %p64 = scmp.eq.s32.totalorder %s63, 0
    %s66 = sadd.s32 %s65, 1
    %s67 = scalar_select %p64, %s65, %s66
    %p70 = pneg %p64
    %p71 = scmp.eq.s32.totalorder %s8, 1
    %p72 = por %p70, %p71
    %p73 = scmp.ne.s32.totalorder %s65, %s68
    %p74 = scmp.eq.s32.totalorder %s8, 0
    %p75 = por %p73, %p74
    %p76 = scmp.ne.s32.totalorder %s65, %s68
    %p77 = scmp.eq.s32.totalorder %s13, 1
    %p78 = por %p76, %p77
    %p79 = scmp.ne.s32.totalorder %s68, %s69
    %p80 = scmp.eq.s32.totalorder %s13, 0
    %p81 = por %p79, %p80
    %p82 = scmp.ne.s32.totalorder %s68, %s69
    %p83 = scmp.eq.s32.totalorder %s14, 1
    %p84 = por %p82, %p83
    %p86 = scmp.ne.s32.totalorder %s69, %s85
    %p87 = scmp.eq.s32.totalorder %s14, 0
    %p88 = por %p86, %p87
    %p89 = scmp.le.s32.totalorder 1, %s8
    %p90 = scmp.lt.s32.totalorder %s8, 3
    %p91 = pnand %p89, %p90
    %p92 = pneg %p91
    // Predicated region
    $region9: #{tpu_custom_call.1} parent=5 // pred_check
      _
    $region10: #{tpu_custom_call.1} parent=5 // pred_check_branch
      %94 = sbr.rel (%p91) target = $region12
    $region11: #{tpu_custom_call.1} parent=5 // pred_region
      %s95 = ssub.s32 %s8, 1
      // Predicated region
      $region13: #{tpu_custom_call.1} parent=11 // pred_check
        %p96 = pneg %p55
      $region14: #{tpu_custom_call.1} parent=11 // pred_check_branch
        %98 = sbr.rel (%p96) target = $region16
      $region15: #{tpu_custom_call.1} parent=11 // pred_region
        _
      $region16: #{tpu_custom_call.1} parent=11 // pred_fallthru
        _
    $region12: #{tpu_custom_call.1} parent=5 // pred_fallthru
      _
    %p99 = scmp.lt.s32.totalorder %s8, 2
    // Predicated region
    $region17: #{tpu_custom_call.1} parent=5 // pred_check
      %p100 = pneg %p99
    $region18: #{tpu_custom_call.1} parent=5 // pred_check_branch
      %102 = sbr.rel (%p100) target = $region20
    $region19: #{tpu_custom_call.1} parent=5 // pred_region
      // Predicated region
      $region21: #{tpu_custom_call.1} parent=19 // pred_check
        %p103 = pneg %p28
      $region22: #{tpu_custom_call.1} parent=19 // pred_check_branch
        %105 = sbr.rel (%p103) target = $region24
      $region23: #{tpu_custom_call.1} parent=19 // pred_region
        %s106 = smul.u32 4, %s8
        %p107 = scmp.lt.s32.totalorder %s106, 7
        %s108 = scalar_select %p107, %s106, 7
        %s109 = smul.addr %s108, 8
        %s110 = scalar_lea.vmem %s0, %s109
        %s111 = smul.u32 4, %s8
      $region24: #{tpu_custom_call.1} parent=19 // pred_fallthru
        _
    $region20: #{tpu_custom_call.1} parent=5 // pred_fallthru
      _
    %p112 = scmp.le.s32.totalorder 1, %s8
    %p113 = scmp.lt.s32.totalorder %s8, 3
    %p114 = pnand %p112, %p113
    %p115 = pneg %p114
    // Predicated region
    $region25: #{tpu_custom_call.1} parent=5 // pred_check
      _
    $region26: #{tpu_custom_call.1} parent=5 // pred_check_branch
      %117 = sbr.rel (%p114) target = $region28
    $region27: #{tpu_custom_call.1} parent=5 // pred_region
      %s118 = ssub.s32 %s8, 1
      %s119 = smul.u32 4, %s13
      %p120 = scmp.lt.s32.totalorder %s119, 7
      %s121 = scalar_select %p120, %s119, 7
      %s122 = smul.addr %s121, 8
      %s123 = scalar_lea.vmem %s0, %s122
      %p124 = pneg %p34
      %p125 = pneg %p31
      %p126 = pneg %p55
      %p127 = pneg %p52
      %p128 = pneg %p81
      %p129 = pneg %p78
      %s130 = smul.u32 4, %s13
      %p131 = scmp.lt.s32.totalorder %s130, 7
      %s132 = scalar_select %p131, %s130, 7
      %s133 = smul.addr %s132, 8
      %s134 = scalar_lea.vmem %s2, %s133
      %s135 = smul.u32 4, %s13
      %p136 = scmp.lt.s32.totalorder %s135, 7
      %s137 = scalar_select %p136, %s135, 7
      %s138 = smul.addr %s137, 8
      %s139 = scalar_lea.vmem %s0, %s138
      %s140 = smul.u32 4, %s13
      %s141 = smul.u32 4, %s13
      %p142 = scmp.lt.s32.totalorder %s141, 7
      %s143 = scalar_select %p142, %s141, 7
      %s144 = smul.addr %s143, 8
      %s145 = scalar_lea.vmem %s2, %s144
      %s146 = smul.u32 4, %s13
      %v147 = vld [vmem:[%s139] sm:$0xff]
      %v148 = vld [vmem:[%s139 + $0x8] sm:$0xff]
      %v149 = vld [vmem:[%s139 + $0x10] sm:$0xff]
      %v150 = vld [vmem:[%s139 + $0x18] sm:$0xff]
      %v151 = vld [vmem:[%s1] sm:$0xff]
      %v152 = vld [vmem:[%s1 + $0x8] sm:$0xff]
      %vm153 = vcmask 130048
      %v155 = vsel %vm153, %v147, 0
      %v158 = vsel %vm153, %v148, 0
      %v161 = vsel %vm153, %v149, 0
      %v164 = vsel %vm153, %v150, 0
      %166 = vmatprep.subr.mxu0 0.0
      %167 = vmatpush1.msra.mxu0 %v151
      %168 = vmatprep.subr.mxu0 0.0
      %169 = vmatpush1.msra.mxu0 %v152
      %170 = vmatprep.subr.mxu0 0.0
      %171 = vmatpush1.msra.mxu0 0.0
      %172 = vmatprep.subr.mxu0 0.0
      %173 = vmatpush1.msra.mxu0 0.0
      %174 = vmatprep.subr.mxu0 0.0
      %175 = vmatpush1.msra.mxu0 0.0
      %176 = vmatprep.subr.mxu0 0.0
      %177 = vmatpush1.msra.mxu0 0.0
      %178 = vmatprep.subr.mxu0 0.0
      %179 = vmatpush1.msra.mxu0 0.0
      %180 = vmatprep.subr.mxu0 0.0
      %181 = vmatpush1.msra.mxu0 0.0
      %182 = vmatprep.subr.mxu0 0.0
      %183 = vmatpush1.msra.mxu0 0.0
      %184 = vmatprep.subr.mxu0 0.0
      %185 = vmatpush1.msra.mxu0 0.0
      %186 = vmatprep.subr.mxu0 0.0
      %187 = vmatpush1.msra.mxu0 0.0
      %188 = vmatprep.subr.mxu0 0.0
      %189 = vmatpush1.msra.mxu0 0.0
      %190 = vmatprep.subr.mxu0 0.0
      %191 = vmatpush1.msra.mxu0 0.0
      %192 = vmatprep.subr.mxu0 0.0
      %193 = vmatpush1.msra.mxu0 0.0
      %194 = vmatprep.subr.mxu0 0.0
      %195 = vmatpush1.msra.mxu0 0.0
      %196 = vmatprep.subr.mxu0 0.0
      %197 = vmatpush1.msra.mxu0 0.0
      %198 = vmatprep.subr.mxu0 0.0
      %199 = vmatpush1.msra.mxu0 0.0
      %200 = vmatprep.subr.mxu0 0.0
      %201 = vmatpush1.msra.mxu0 0.0
      %202 = vmatprep.subr.mxu0 0.0
      %203 = vmatpush1.msra.mxu0 0.0
      %204 = vmatprep.subr.mxu0 0.0
      %205 = vmatpush1.msra.mxu0 0.0
      %206 = vmatprep.subr.mxu0 0.0
      %207 = vmatpush1.msra.mxu0 0.0
      %208 = vmatprep.subr.mxu0 0.0
      %209 = vmatpush1.msra.mxu0 0.0
      %210 = vmatprep.subr.mxu0 0.0
      %211 = vmatpush1.msra.mxu0 0.0
      %212 = vmatprep.subr.mxu0 0.0
      %213 = vmatpush1.msra.mxu0 0.0
      %214 = vmatprep.subr.mxu0 0.0
      %215 = vmatpush1.msra.mxu0 0.0
      %216 = vmatprep.subr.mxu0 0.0
      %217 = vmatpush1.msra.mxu0 0.0
      %218 = vmatprep.subr.mxu0 0.0
      %219 = vmatpush1.msra.mxu0 0.0
      %220 = vmatprep.subr.mxu0 0.0
      %221 = vmatpush1.msra.mxu0 0.0
      %222 = vmatprep.subr.mxu0 0.0
      %223 = vmatpush1.msra.mxu0 0.0
      %224 = vmatprep.subr.mxu0 0.0
      %225 = vmatpush1.msra.mxu0 0.0
      %226 = vmatprep.subr.mxu0 0.0
      %227 = vmatpush1.msra.mxu0 0.0
      %228 = vmatprep.subr.mxu0 0.0
      %229 = vmatpush1.msra.mxu0 0.0
      %230 = vmatprep.mubr.f32.mxu0 0.0
      %231 = vmatmul.mubr.f32.gmra.mrb[0].mxu0 %v155
      %v232 = vpop.f32.mrb[0].mxu0
      %v233 = vadd.f32 0.0, %v232
      %v234 = vpop.f32.mrb[0].mxu0
      %235 = vmatprep.mubr.f32.mxu0 0.0
      %236 = vmatmul.mubr.f32.gmra.mrb[0].mxu0 %v158
      %v237 = vpop.f32.mrb[0].mxu0
      %v238 = vadd.f32 0.0, %v237
      %v239 = vpop.f32.mrb[0].mxu0
      %240 = vmatprep.mubr.f32.mxu0 0.0
      %241 = vmatmul.mubr.f32.gmra.mrb[0].mxu0 %v161
      %v242 = vpop.f32.mrb[0].mxu0
      %v243 = vadd.f32 0.0, %v242
      %v244 = vpop.f32.mrb[0].mxu0
      %245 = vmatprep.mubr.f32.mxu0 0.0
      %246 = vmatmul.mubr.f32.gmra.mrb[0].mxu0 %v164
      %v247 = vpop.f32.mrb[0].mxu0
      %v248 = vadd.f32 0.0, %v247
      %v249 = vpop.f32.mrb[0].mxu0
      %250 = vdwg.mxu0
      %vm251 = vcmask 261120
      %252 = vst.msk [vmem:[%s145] sm:$0xff] %vm251, %v233
      %253 = vst.msk [vmem:[%s145 + $0x8] sm:$0xff] %vm251, %v238
      %254 = vst.msk [vmem:[%s145 + $0x10] sm:$0xff] %vm251, %v243
      %255 = vst.msk [vmem:[%s145 + $0x18] sm:$0xff] %vm251, %v248
      %s256 = smul.u32 4, %s13
      %p257 = scmp.lt.s32.totalorder %s256, 7
      %s258 = scalar_select %p257, %s256, 7
      %s259 = smul.addr %s258, 8
      %s260 = scalar_lea.vmem %s2, %s259
      // Predicated region
      $region29: #{tpu_custom_call.1} parent=27 // pred_check
        %p261 = pneg %p78
      $region30: #{tpu_custom_call.1} parent=27 // pred_check_branch
        %263 = sbr.rel (%p261) target = $region32
      $region31: #{tpu_custom_call.1} parent=27 // pred_region
        %s264 = smul.u32 4, %s13
      $region32: #{tpu_custom_call.1} parent=27 // pred_fallthru
        _
    $region28: #{tpu_custom_call.1} parent=5 // pred_fallthru
      _
    %p265 = scmp.le.s32.totalorder 2, %s8
    // Predicated region
    $region33: #{tpu_custom_call.1} parent=5 // pred_check
      %p266 = pneg %p265
    $region34: #{tpu_custom_call.1} parent=5 // pred_check_branch
      %268 = sbr.rel (%p266) target = $region36
    $region35: #{tpu_custom_call.1} parent=5 // pred_region
      %s269 = ssub.s32 %s8, 2
      // Predicated region
      $region37: #{tpu_custom_call.1} parent=35 // pred_check
        %p270 = pneg %p84
      $region38: #{tpu_custom_call.1} parent=35 // pred_check_branch
        %272 = sbr.rel (%p270) target = $region40
      $region39: #{tpu_custom_call.1} parent=35 // pred_region
        %s273 = smul.u32 4, %s14
        %p274 = scmp.lt.s32.totalorder %s273, 7
        %s275 = scalar_select %p274, %s273, 7
        %s276 = smul.addr %s275, 8
        %s277 = scalar_lea.vmem %s2, %s276
      $region40: #{tpu_custom_call.1} parent=35 // pred_fallthru
        _
    $region36: #{tpu_custom_call.1} parent=5 // pred_fallthru
      _
  $region6: #{tpu_custom_call.1} parent=0 // loop_footer
    %s12 = sadd.s32 1, %s8
  $region7: #{tpu_custom_call.1} parent=0 // loop_footer_branch
    %7 = sbr.rel target = $region3
  $region8: #{tpu_custom_call.1} parent=0 // loop_exit
    _

</llo_original>
